<compile_context>
chip_gen: v6e
topology: v6e:2x2x1
jax: 0.10.0
libtpu: 0.0.40
codegen_flags: <defaults>
</compile_context>

<pallas_src>
import functools

import numpy as np

import jax
import jax.numpy as jnp
from jax.experimental import pallas as pl
from jax.experimental.pallas import tpu as pltpu


_VMEM_LIMIT_BYTES = 32 * 1024 * 1024    # <= default scoped VMEM on v7x, safe on v5e/v6e
_TARGET_BLOCK_BYTES = 1 << 20           # ~1 MiB per f32 input block (double-buffered)
_PAD_NOISE = 1e30                       # padded rows sort last and are never dropped


# ----------------------------- helpers ---------------------------------------

def _scalar_tile(value, dtype):
    """(1, 8, 128) tile holding `value` at [0, 0, 0] and zeros elsewhere."""
    r = jax.lax.broadcasted_iota(jnp.int32, (8, 128), 0)
    c = jax.lax.broadcasted_iota(jnp.int32, (8, 128), 1)
    tile = jnp.where((r == 0) & (c == 0), value.astype(dtype), jnp.zeros((), dtype))
    return tile[None]


def _choose_channel_block(n, hw):
    """Channels per grid step (sublanes) so one f32 block is ~1 MiB."""
    cap = max(8, _TARGET_BLOCK_BYTES // max(1, hw * 4))
    if n <= cap:
        return n, n
    tn = max(8, (cap // 8) * 8)
    n_pad = ((n + tn - 1) // tn) * tn
    return tn, n_pad


def _window_validity_masks(H, W, offs):
    """(2*len(offs), H*W) f32 masks.  Rows [0, bs) validate w+o in [0, W);
    rows [bs, 2*bs) validate the h shift (flat index + o*W in [0, H*W))."""
    hw = H * W
    s = np.arange(hw, dtype=np.int64)
    w = s % W
    hmasks = [((w + o >= 0) & (w + o < W)) for o in offs]
    vmasks = [((s + o * W >= 0) & (s + o * W < hw)) for o in offs]
    return np.stack(hmasks + vmasks).astype(np.float32)


def _kth_smallest_nonneg_f32(values, k):
    """Exact k-th smallest (1-indexed) of a flat array of non-negative f32s.

    Four streaming histogram (radix-select) passes over the data: the IEEE-754
    bit pattern of a non-negative float is monotone in its value, so selecting
    byte-by-byte from the MSB reproduces torch.topk(..., largest=False)[-1]
    without an O(n log n) global sort.
    # TODO(synk): the 256-bin counting passes currently lower to XLA
    # scatter-adds; for very large tensors they could be a small Pallas kernel
    # fused with the randomised-threshold pass so rt is streamed only once.
    """
    bits = jax.lax.bitcast_convert_type(values.astype(jnp.float32), jnp.uint32)
    prefix = jnp.uint32(0)
    rank = jnp.int32(k)
    for level, shift in enumerate((24, 16, 8, 0)):
        if level == 0:
            cand = jnp.ones(bits.shape, dtype=jnp.int32)
        else:
            hi = jnp.uint32(0xFFFFFFFF) << jnp.uint32(shift + 8)
            cand = ((bits & hi) == prefix).astype(jnp.int32)
        byte = ((bits >> jnp.uint32(shift)) & jnp.uint32(0xFF)).astype(jnp.int32)
        hist = jnp.zeros((256,), jnp.int32).at[byte].add(cand)
        csum = jnp.cumsum(hist)
        sel = jnp.argmax(csum >= rank).astype(jnp.int32)
        below = jnp.where(sel > 0, csum[jnp.maximum(sel - 1, 0)], 0)
        rank = rank - below
        prefix = prefix | (sel.astype(jnp.uint32) << jnp.uint32(shift))
    return jax.lax.bitcast_convert_type(prefix, jnp.float32)


# ----------------------------- kernels ----------------------------------------

def _abs_partial_sum_kernel(x_ref, psum_ref):
    """Per-block partial sum of |x| (reduced with jnp.sum in the wrapper)."""
    psum_ref[...] = _scalar_tile(
        jnp.sum(jnp.abs(x_ref[...].astype(jnp.float32))), jnp.float32)


def _rand_threshold_kernel(mean_ref, x_ref, u_ref, rt_ref):
    """rt = |x| + 0.1 * u * mean(|x|)   (elementwise, lane-dense blocks)."""
    m = mean_ref[0, 0]
    rt_ref[...] = (jnp.abs(x_ref[...].astype(jnp.float32))
                   + 0.1 * u_ref[...].astype(jnp.float32) * m)


def _make_mask_kernel(H, W, block_size):
    """drop-seed mask -> separable bs x bs window sum via lane rolls -> keep
    mask -> x * keep, plus per-block keep-count partial sums."""
    HW = H * W
    p = block_size // 2
    # Window offsets of avg_pool2d(kernel=bs, stride=1, padding=bs//2), with
    # the [:-1, :-1] crop for even bs already folded in.
    offs = list(range(-p, block_size - p))

    def kernel(bar_ref, vmask_ref, x_ref, rt_ref, out_ref, ksum_ref):
        bar = bar_ref[0, 0]
        drop = (rt_ref[...] < bar).astype(jnp.float32)            # (TN, HW)

        def shifted_sum(src, mask_row0, step):
            # acc[s] = sum_o src[s + o*step] over in-image offsets.  A +d
            # spatial shift is a lane roll by (-d) mod HW; wrapped lanes are
            # exactly the out-of-image ones and the mask zeroes them.
            acc = jnp.zeros_like(src)
            for idx, o in enumerate(offs):
                shift = (-o * step) % HW
                rolled = src if shift == 0 else pltpu.roll(src, shift, axis=1)
                valid = vmask_ref[mask_row0 + idx:mask_row0 + idx + 1, :]
                acc = acc + rolled * valid
            return acc

        hsum = shifted_sum(drop, 0, 1)               # along w
        win = shifted_sum(hsum, len(offs), W)        # along h
        keep = (win == 0.0).astype(jnp.float32)

        out_ref[...] = (x_ref[...].astype(jnp.float32) * keep).astype(out_ref.dtype)
        ksum_ref[...] = _scalar_tile(jnp.sum(keep), jnp.int32)

    return kernel, offs


# ----------------------------- wrapper ----------------------------------------

@functools.partial(jax.jit, static_argnames=("drop_prob", "block_size", "training"))
def reverse_adaptive_dropblock_channel2d(x, u, *, drop_prob, block_size,
                                         training=True):
    """Pallas/TPU implementation of ReverseAdaptiveDropBlockChannel2D.forward.

    x : (B, C, H, W) input (NCHW, as in PyTorch)
    u : (B, C, H, W) uniform[0,1) noise (stand-in for the module's torch.rand)
    """
    assert x.ndim == 4, "Expected input with 4 dimensions (bsize, channels, height, width)"
    if (not training) or drop_prob <= 0.0:
        return x

    B, C, H, W = x.shape
    N, HW = B * C, H * W
    numel = N * HW

    xt = x.reshape(N, HW)
    ut = u.reshape(N, HW)

    tn, n_pad = _choose_channel_block(N, HW)
    if n_pad > N:
        xt = jnp.concatenate([xt, jnp.zeros((n_pad - N, HW), xt.dtype)], axis=0)
        # Huge noise => padded rows never fall below the k-th threshold.
        ut = jnp.concatenate(
            [ut, jnp.full((n_pad - N, HW), _PAD_NOISE, ut.dtype)], axis=0)
    grid = (n_pad // tn,)
    g = grid[0]

    blk = pl.BlockSpec((tn, HW), lambda i: (i, 0))
    psum_spec = pl.BlockSpec((1, 8, 128), lambda i: (i, 0, 0))
    smem_scalar = pl.BlockSpec(memory_space=pltpu.MemorySpace.SMEM)
    params = pltpu.CompilerParams(dimension_semantics=("parallel",),
                                  vmem_limit_bytes=_VMEM_LIMIT_BYTES)

    # (1) mean(|x|): per-block partial sums, reduced in the wrapper.
    psum = pl.pallas_call(
        _abs_partial_sum_kernel,
        out_shape=jax.ShapeDtypeStruct((g, 8, 128), jnp.float32),
        grid=grid,
        in_specs=[blk],
        out_specs=psum_spec,
        compiler_params=params,
        cost_estimate=pl.CostEstimate(flops=2 * n_pad * HW, transcendentals=0,
                                      bytes_accessed=n_pad * HW * x.dtype.itemsize),
    )(xt)
    mean_abs = (jnp.sum(psum) / jnp.float32(numel)).reshape(1, 1)

    # (2) randomised thresholds rt = |x| + 0.1 * u * mean(|x|)
    # TODO(synk): rt stays f32 even for bf16 inputs so the order statistic below
    # is exact; a bf16 rt would halve its HBM traffic but change tie-breaking.
    rt = pl.pallas_call(
        _rand_threshold_kernel,
        out_shape=jax.ShapeDtypeStruct((n_pad, HW), jnp.float32),
        grid=grid,
        in_specs=[smem_scalar, blk, blk],
        out_specs=blk,
        compiler_params=params,
        cost_estimate=pl.CostEstimate(
            flops=4 * n_pad * HW, transcendentals=0,
            bytes_accessed=n_pad * HW * (x.dtype.itemsize + u.dtype.itemsize + 4)),
    )(mean_abs, xt, ut)

    # (3) bar = k-th smallest randomised threshold (exact streaming radix select,
    #     replaces torch.topk(..., largest=False) / the previous full sort).
    gamma = drop_prob / (block_size ** 2)
    topk = int(numel * gamma)
    if topk <= 0:
        bar = jnp.zeros((1, 1), jnp.float32)
    else:
        bar = _kth_smallest_nonneg_f32(rt.reshape(-1), topk).reshape(1, 1)

    # (4) seed mask -> separable window sum -> keep mask -> x*keep (+ keep count)
    mask_kernel, offs = _make_mask_kernel(H, W, block_size)
    vmasks = jnp.asarray(_window_validity_masks(H, W, offs))      # (2*bs, HW)
    vmask_spec = pl.BlockSpec((vmasks.shape[0], HW), lambda i: (0, 0))
    out_t, ksum = pl.pallas_call(
        mask_kernel,
        out_shape=(jax.ShapeDtypeStruct((n_pad, HW), x.dtype),
                   jax.ShapeDtypeStruct((g, 8, 128), jnp.int32)),
        grid=grid,
        in_specs=[smem_scalar, vmask_spec, blk, blk],
        out_specs=(blk, psum_spec),
        compiler_params=params,
        cost_estimate=pl.CostEstimate(
            flops=(4 * len(offs) + 6) * n_pad * HW, transcendentals=0,
            bytes_accessed=n_pad * HW * (2 * x.dtype.itemsize + 4)),
    )(bar, vmasks, xt, rt)

    # (5) rescale out * numel / keep_count in plain XLA (fused with the reshape).
    # Padded channels are never dropped, so subtract their keep contribution.
    keep_count = jnp.sum(ksum) - jnp.int32((n_pad - N) * HW)
    # NOTE: PyTorch divides by mask.sum() unguarded (inf/nan if everything is
    # dropped); jnp.maximum only changes that degenerate case (output -> 0).
    scale = jnp.float32(numel) / jnp.maximum(keep_count.astype(jnp.float32), 1.0)
    out = (out_t[:N].astype(jnp.float32) * scale).astype(x.dtype)
    return out.reshape(B, C, H, W)


# --------------------------- pure-JAX reference --------------------------------

def _reference_forward(x, u, drop_prob, block_size):
    B, C, H, W = x.shape
    absx = jnp.abs(x)
    mean = jnp.mean(absx)
    rt = absx + 0.1 * u * mean
    numel = x.size
    gamma = drop_prob / (block_size ** 2)
    k = int(numel * gamma)
    bar = jnp.sort(rt.reshape(-1))[k - 1] if k > 0 else jnp.float32(0.0)
    drop = (rt < bar).astype(jnp.float32)
    p = block_size // 2
    padded = jnp.pad(drop, ((0, 0), (0, 0),
                            (p, block_size - 1 - p), (p, block_size - 1 - p)))
    win = sum(padded[:, :, dh:dh + H, dw:dw + W]
              for dh in range(block_size) for dw in range(block_size))
    keep = (win == 0).astype(jnp.float32)
    out = x * keep
    return out * numel / jnp.sum(keep)


# ------------------------------- main -------------------------------------------

if __name__ == "__main__":
    key = jax.random.PRNGKey(0)
    kx, ku = jax.random.split(key)
    B, C, H, W = 2, 4, 16, 16
    drop_prob = 0.25
    x = jax.random.normal(kx, (B, C, H, W), dtype=jnp.float32)
    # torch.rand stand-in noise (deterministic; the RNG stream necessarily differs).
    u = jax.random.uniform(ku, (B, C, H, W), dtype=jnp.float32)

    for block_size in (3, 4):   # odd and even (even exercises the [:-1,:-1] crop)
        out = reverse_adaptive_dropblock_channel2d(
            x, u, drop_prob=drop_prob, block_size=block_size, training=True)
        out = jax.block_until_ready(out)
        ref = _reference_forward(x, u, drop_prob, block_size)
        if not jnp.allclose(out, ref, rtol=1e-4, atol=1e-4):
            raise SystemExit(f"mismatch vs reference for block_size={block_size}")
        assert out.shape == x.shape and out.dtype == x.dtype

    print("KERNEL_OK")
</pallas_src>

<mosaic_0001>
module attributes {stable_mosaic.version = 11 : i64} {
  func.func private @main(%arg0: i32) attributes {dimension_semantics = [#tpu.dimension_semantics<core_parallel>], iteration_bounds = array<i64: 2>, tpu.core_type = #tpu.core_type<sc_scalar_subcore>, window_params = []} {
    return
  }
}

module attributes {stable_mosaic.version = 11 : i64} {
  func.func private @main(%arg0: i32) attributes {dimension_semantics = [#tpu.dimension_semantics<core_parallel>], iteration_bounds = array<i64: 2>, tpu.core_type = #tpu.core_type<sc_scalar_subcore>, window_params = []} {
    return
  }
}

module attributes {stable_mosaic.version = 11 : i64} {
  func.func @_abs_partial_sum_kernel(%arg0: i32, %arg1: memref<8x256xf32, #tpu.memory_space<vmem>>, %arg2: memref<1x8x128xf32, #tpu.memory_space<vmem>>) attributes {dimension_semantics = [#tpu.dimension_semantics<parallel>], iteration_bounds = array<i64: 1>, scalar_prefetch = 0 : i64, scratch_operands = 0 : i64, tpu.core_type = #tpu.core_type<tc>, window_params = [{transform_indices = @transform_0, window_bounds = array<i64: 8, 256>}, {transform_indices = @transform_1, window_bounds = array<i64: 1, 8, 128>}]} {
    %c0 = arith.constant 0 : index
    %c0_0 = arith.constant 0 : index
    %0 = vector.load %arg1[%c0, %c0_0] : memref<8x256xf32, #tpu.memory_space<vmem>>, vector<8x256xf32>
    %1 = math.absf %0 : vector<8x256xf32>
    %2 = vector.shape_cast %1 : vector<8x256xf32> to vector<1x8x256xf32>
    %cst = arith.constant dense<0.000000e+00> : vector<1xf32>
    %3 = vector.multi_reduction <add>, %2, %cst [1, 2] : vector<1x8x256xf32> to vector<1xf32>
    %4 = vector.shape_cast %3 : vector<1xf32> to vector<1x1x1xf32>
    %5 = vector.extract %4[0, 0, 0] : f32 from vector<1x1x1xf32>
    %6 = tpu.iota {dimensions = array<i32: 0>} : vector<8x128xi32>
    %7 = tpu.iota {dimensions = array<i32: 1>} : vector<8x128xi32>
    %c0_i32 = arith.constant 0 : i32
    %8 = vector.broadcast %c0_i32 : i32 to vector<8x128xi32>
    %9 = arith.cmpi eq, %6, %8 : vector<8x128xi32>
    %c0_i32_1 = arith.constant 0 : i32
    %10 = vector.broadcast %c0_i32_1 : i32 to vector<8x128xi32>
    %11 = arith.cmpi eq, %7, %10 : vector<8x128xi32>
    %12 = arith.andi %9, %11 : vector<8x128xi1>
    %cst_2 = arith.constant 0.000000e+00 : f32
    %13 = vector.broadcast %5 : f32 to vector<8x128xf32>
    %14 = vector.broadcast %cst_2 : f32 to vector<8x128xf32>
    %15 = arith.select %12, %13, %14 : vector<8x128xi1>, vector<8x128xf32>
    %16 = vector.shape_cast %15 : vector<8x128xf32> to vector<1x8x128xf32>
    %c0_3 = arith.constant 0 : index
    %c0_4 = arith.constant 0 : index
    %c0_5 = arith.constant 0 : index
    %17 = vector.load %arg2[%c0_3, %c0_4, %c0_5] : memref<1x8x128xf32, #tpu.memory_space<vmem>>, vector<1x8x128xf32>
    tpu.vector_store %arg2[%c0_3, %c0_4, %c0_5], %16 {strides = array<i32>} : memref<1x8x128xf32, #tpu.memory_space<vmem>>, vector<1x8x128xf32>,
    return
  }
  func.func @transform_0(%arg0: i32) -> (i32, i32) {
    %c0_i32 = arith.constant 0 : i32
    %c0_i32_0 = arith.constant 0 : i32
    return %arg0, %c0_i32 : i32, i32
  }
  func.func @transform_1(%arg0: i32) -> (i32, i32, i32) {
    %c0_i32 = arith.constant 0 : i32
    %c0_i32_0 = arith.constant 0 : i32
    %c0_i32_1 = arith.constant 0 : i32
    return %arg0, %c0_i32, %c0_i32_0 : i32, i32, i32
  }
}

module attributes {stable_mosaic.version = 11 : i64} {
  func.func @_rand_threshold_kernel(%arg0: i32, %arg1: memref<1x1xf32, #tpu.memory_space<smem>>, %arg2: memref<8x256xf32, #tpu.memory_space<vmem>>, %arg3: memref<8x256xf32, #tpu.memory_space<vmem>>, %arg4: memref<8x256xf32, #tpu.memory_space<vmem>>) attributes {dimension_semantics = [#tpu.dimension_semantics<parallel>], iteration_bounds = array<i64: 1>, scalar_prefetch = 0 : i64, scratch_operands = 0 : i64, tpu.core_type = #tpu.core_type<tc>, window_params = [{transform_indices = @transform_0, window_bounds = array<i64: 1, 1>}, {transform_indices = @transform_1, window_bounds = array<i64: 8, 256>}, {transform_indices = @transform_2, window_bounds = array<i64: 8, 256>}, {transform_indices = @transform_3, window_bounds = array<i64: 8, 256>}]} {
    %c0 = arith.constant 0 : index
    %c0_0 = arith.constant 0 : index
    %0 = memref.load %arg1[%c0, %c0_0] : memref<1x1xf32, #tpu.memory_space<smem>>
    %c0_1 = arith.constant 0 : index
    %c0_2 = arith.constant 0 : index
    %1 = vector.load %arg2[%c0_1, %c0_2] : memref<8x256xf32, #tpu.memory_space<vmem>>, vector<8x256xf32>
    %2 = math.absf %1 : vector<8x256xf32>
    %c0_3 = arith.constant 0 : index
    %c0_4 = arith.constant 0 : index
    %3 = vector.load %arg3[%c0_3, %c0_4] : memref<8x256xf32, #tpu.memory_space<vmem>>, vector<8x256xf32>
    %cst = arith.constant 1.000000e-01 : f32
    %4 = vector.broadcast %cst : f32 to vector<8x256xf32>
    %5 = arith.mulf %4, %3 : vector<8x256xf32>
    %6 = vector.broadcast %0 : f32 to vector<8x256xf32>
    %7 = arith.mulf %5, %6 : vector<8x256xf32>
    %8 = arith.addf %2, %7 : vector<8x256xf32>
    %c0_5 = arith.constant 0 : index
    %c0_6 = arith.constant 0 : index
    %9 = vector.load %arg4[%c0_5, %c0_6] : memref<8x256xf32, #tpu.memory_space<vmem>>, vector<8x256xf32>
    tpu.vector_store %arg4[%c0_5, %c0_6], %8 {strides = array<i32>} : memref<8x256xf32, #tpu.memory_space<vmem>>, vector<8x256xf32>,
    return
  }
  func.func @transform_0(%arg0: i32) -> (i32, i32) {
    %c0_i32 = arith.constant 0 : i32
    %c0_i32_0 = arith.constant 0 : i32
    %c0_i32_1 = arith.constant 0 : i32
    return %c0_i32, %c0_i32_0 : i32, i32
  }
  func.func @transform_1(%arg0: i32) -> (i32, i32) {
    %c0_i32 = arith.constant 0 : i32
    %c0_i32_0 = arith.constant 0 : i32
    return %arg0, %c0_i32 : i32, i32
  }
  func.func @transform_2(%arg0: i32) -> (i32, i32) {
    %c0_i32 = arith.constant 0 : i32
    %c0_i32_0 = arith.constant 0 : i32
    return %arg0, %c0_i32 : i32, i32
  }
  func.func @transform_3(%arg0: i32) -> (i32, i32) {
    %c0_i32 = arith.constant 0 : i32
    %c0_i32_0 = arith.constant 0 : i32
    return %arg0, %c0_i32 : i32, i32
  }
}

module attributes {stable_mosaic.version = 11 : i64} {
  func.func @kernel(%arg0: i32, %arg1: memref<1x1xf32, #tpu.memory_space<smem>>, %arg2: memref<6x256xf32, #tpu.memory_space<vmem>>, %arg3: memref<8x256xf32, #tpu.memory_space<vmem>>, %arg4: memref<8x256xf32, #tpu.memory_space<vmem>>, %arg5: memref<8x256xf32, #tpu.memory_space<vmem>>, %arg6: memref<1x8x128xi32, #tpu.memory_space<vmem>>) attributes {dimension_semantics = [#tpu.dimension_semantics<parallel>], iteration_bounds = array<i64: 1>, scalar_prefetch = 0 : i64, scratch_operands = 0 : i64, tpu.core_type = #tpu.core_type<tc>, window_params = [{transform_indices = @transform_0, window_bounds = array<i64: 1, 1>}, {pipeline_mode = #tpu.pipeline_mode<synchronous>, transform_indices = @transform_1, window_bounds = array<i64: 6, 256>}, {transform_indices = @transform_2, window_bounds = array<i64: 8, 256>}, {transform_indices = @transform_3, window_bounds = array<i64: 8, 256>}, {transform_indices = @transform_4, window_bounds = array<i64: 8, 256>}, {transform_indices = @transform_5, window_bounds = array<i64: 1, 8, 128>}]} {
    %c0 = arith.constant 0 : index
    %c0_0 = arith.constant 0 : index
    %0 = memref.load %arg1[%c0, %c0_0] : memref<1x1xf32, #tpu.memory_space<smem>>
    %c0_1 = arith.constant 0 : index
    %c0_2 = arith.constant 0 : index
    %1 = vector.load %arg4[%c0_1, %c0_2] : memref<8x256xf32, #tpu.memory_space<vmem>>, vector<8x256xf32>
    %2 = vector.broadcast %0 : f32 to vector<8x256xf32>
    %3 = arith.cmpf olt, %1, %2 : vector<8x256xf32>
    %4 = arith.extui %3 : vector<8x256xi1> to vector<8x256xi32>
    %5 = arith.sitofp %4 : vector<8x256xi32> to vector<8x256xf32>
    %cst = arith.constant 0.000000e+00 : f32
    %6 = vector.broadcast %cst : f32 to vector<8x256xf32>
    %c1_i32 = arith.constant 1 : i32
    %7 = tpu.dynamic_rotate %5 by %c1_i32 dim 1 : vector<8x256xf32>, i32 -> vector<8x256xf32>
    %c0_3 = arith.constant 0 : index
    %c0_4 = arith.constant 0 : index
    %8 = vector.load %arg2[%c0_3, %c0_4] : memref<6x256xf32, #tpu.memory_space<vmem>>, vector<1x256xf32>
    %9 = vector.broadcast %8 : vector<1x256xf32> to vector<8x256xf32>
    %10 = arith.mulf %7, %9 : vector<8x256xf32>
    %11 = arith.addf %6, %10 : vector<8x256xf32>
    %c1 = arith.constant 1 : index
    %c0_5 = arith.constant 0 : index
    %12 = vector.load %arg2[%c1, %c0_5] : memref<6x256xf32, #tpu.memory_space<vmem>>, vector<1x256xf32>
    %13 = vector.broadcast %12 : vector<1x256xf32> to vector<8x256xf32>
    %14 = arith.mulf %5, %13 : vector<8x256xf32>
    %15 = arith.addf %11, %14 : vector<8x256xf32>
    %c255_i32 = arith.constant 255 : i32
    %16 = tpu.dynamic_rotate %5 by %c255_i32 dim 1 : vector<8x256xf32>, i32 -> vector<8x256xf32>
    %c2 = arith.constant 2 : index
    %c0_6 = arith.constant 0 : index
    %17 = vector.load %arg2[%c2, %c0_6] : memref<6x256xf32, #tpu.memory_space<vmem>>, vector<1x256xf32>
    %18 = vector.broadcast %17 : vector<1x256xf32> to vector<8x256xf32>
    %19 = arith.mulf %16, %18 : vector<8x256xf32>
    %20 = arith.addf %15, %19 : vector<8x256xf32>
    %cst_7 = arith.constant 0.000000e+00 : f32
    %21 = vector.broadcast %cst_7 : f32 to vector<8x256xf32>
    %c16_i32 = arith.constant 16 : i32
    %22 = tpu.dynamic_rotate %20 by %c16_i32 dim 1 : vector<8x256xf32>, i32 -> vector<8x256xf32>
    %c3 = arith.constant 3 : index
    %c0_8 = arith.constant 0 : index
    %23 = vector.load %arg2[%c3, %c0_8] : memref<6x256xf32, #tpu.memory_space<vmem>>, vector<1x256xf32>
    %24 = vector.broadcast %23 : vector<1x256xf32> to vector<8x256xf32>
    %25 = arith.mulf %22, %24 : vector<8x256xf32>
    %26 = arith.addf %21, %25 : vector<8x256xf32>
    %c4 = arith.constant 4 : index
    %c0_9 = arith.constant 0 : index
    %27 = vector.load %arg2[%c4, %c0_9] : memref<6x256xf32, #tpu.memory_space<vmem>>, vector<1x256xf32>
    %28 = vector.broadcast %27 : vector<1x256xf32> to vector<8x256xf32>
    %29 = arith.mulf %20, %28 : vector<8x256xf32>
    %30 = arith.addf %26, %29 : vector<8x256xf32>
    %c240_i32 = arith.constant 240 : i32
    %31 = tpu.dynamic_rotate %20 by %c240_i32 dim 1 : vector<8x256xf32>, i32 -> vector<8x256xf32>
    %c5 = arith.constant 5 : index
    %c0_10 = arith.constant 0 : index
    %32 = vector.load %arg2[%c5, %c0_10] : memref<6x256xf32, #tpu.memory_space<vmem>>, vector<1x256xf32>
    %33 = vector.broadcast %32 : vector<1x256xf32> to vector<8x256xf32>
    %34 = arith.mulf %31, %33 : vector<8x256xf32>
    %35 = arith.addf %30, %34 : vector<8x256xf32>
    %cst_11 = arith.constant 0.000000e+00 : f32
    %36 = vector.broadcast %cst_11 : f32 to vector<8x256xf32>
    %37 = arith.cmpf oeq, %35, %36 : vector<8x256xf32>
    %38 = arith.extui %37 : vector<8x256xi1> to vector<8x256xi32>
    %39 = arith.sitofp %38 : vector<8x256xi32> to vector<8x256xf32>
    %c0_12 = arith.constant 0 : index
    %c0_13 = arith.constant 0 : index
    %40 = vector.load %arg3[%c0_12, %c0_13] : memref<8x256xf32, #tpu.memory_space<vmem>>, vector<8x256xf32>
    %41 = arith.mulf %40, %39 : vector<8x256xf32>
    %c0_14 = arith.constant 0 : index
    %c0_15 = arith.constant 0 : index
    %42 = vector.load %arg5[%c0_14, %c0_15] : memref<8x256xf32, #tpu.memory_space<vmem>>, vector<8x256xf32>
    tpu.vector_store %arg5[%c0_14, %c0_15], %41 {strides = array<i32>} : memref<8x256xf32, #tpu.memory_space<vmem>>, vector<8x256xf32>,
    %43 = vector.shape_cast %39 : vector<8x256xf32> to vector<1x8x256xf32>
    %cst_16 = arith.constant dense<0.000000e+00> : vector<1xf32>
    %44 = vector.multi_reduction <add>, %43, %cst_16 [1, 2] : vector<1x8x256xf32> to vector<1xf32>
    %45 = vector.shape_cast %44 : vector<1xf32> to vector<1x1x1xf32>
    %46 = vector.extract %45[0, 0, 0] : f32 from vector<1x1x1xf32>
    %47 = tpu.iota {dimensions = array<i32: 0>} : vector<8x128xi32>
    %48 = tpu.iota {dimensions = array<i32: 1>} : vector<8x128xi32>
    %c0_i32 = arith.constant 0 : i32
    %49 = vector.broadcast %c0_i32 : i32 to vector<8x128xi32>
    %50 = arith.cmpi eq, %47, %49 : vector<8x128xi32>
    %c0_i32_17 = arith.constant 0 : i32
    %51 = vector.broadcast %c0_i32_17 : i32 to vector<8x128xi32>
    %52 = arith.cmpi eq, %48, %51 : vector<8x128xi32>
    %53 = arith.andi %50, %52 : vector<8x128xi1>
    %54 = arith.fptosi %46 : f32 to i32
    %c0_i32_18 = arith.constant 0 : i32
    %55 = vector.broadcast %54 : i32 to vector<8x128xi32>
    %56 = vector.broadcast %c0_i32_18 : i32 to vector<8x128xi32>
    %57 = arith.select %53, %55, %56 : vector<8x128xi1>, vector<8x128xi32>
    %58 = vector.shape_cast %57 : vector<8x128xi32> to vector<1x8x128xi32>
    %c0_19 = arith.constant 0 : index
    %c0_20 = arith.constant 0 : index
    %c0_21 = arith.constant 0 : index
    %59 = vector.load %arg6[%c0_19, %c0_20, %c0_21] : memref<1x8x128xi32, #tpu.memory_space<vmem>>, vector<1x8x128xi32>
    tpu.vector_store %arg6[%c0_19, %c0_20, %c0_21], %58 {strides = array<i32>} : memref<1x8x128xi32, #tpu.memory_space<vmem>>, vector<1x8x128xi32>,
    return
  }
  func.func @transform_0(%arg0: i32) -> (i32, i32) {
    %c0_i32 = arith.constant 0 : i32
    %c0_i32_0 = arith.constant 0 : i32
    %c0_i32_1 = arith.constant 0 : i32
    return %c0_i32, %c0_i32_0 : i32, i32
  }
  func.func @transform_1(%arg0: i32) -> (i32, i32) {
    %c0_i32 = arith.constant 0 : i32
    %c0_i32_0 = arith.constant 0 : i32
    %c0_i32_1 = arith.constant 0 : i32
    return %c0_i32, %c0_i32_0 : i32, i32
  }
  func.func @transform_2(%arg0: i32) -> (i32, i32) {
    %c0_i32 = arith.constant 0 : i32
    %c0_i32_0 = arith.constant 0 : i32
    return %arg0, %c0_i32 : i32, i32
  }
  func.func @transform_3(%arg0: i32) -> (i32, i32) {
    %c0_i32 = arith.constant 0 : i32
    %c0_i32_0 = arith.constant 0 : i32
    return %arg0, %c0_i32 : i32, i32
  }
  func.func @transform_4(%arg0: i32) -> (i32, i32) {
    %c0_i32 = arith.constant 0 : i32
    %c0_i32_0 = arith.constant 0 : i32
    return %arg0, %c0_i32 : i32, i32
  }
  func.func @transform_5(%arg0: i32) -> (i32, i32, i32) {
    %c0_i32 = arith.constant 0 : i32
    %c0_i32_0 = arith.constant 0 : i32
    %c0_i32_1 = arith.constant 0 : i32
    return %arg0, %c0_i32, %c0_i32_0 : i32, i32, i32
  }
}

</mosaic_0001>

<llo_original>
// kernel: reverse_adaptive_dropblock_channel2d.3
$region0: #{reverse_adaptive_dropblock_channel2d.3}
  #allocation0 [shape = 'u32[]', space=smem, size = 0x4, offset = 0x4, fixed_abs, tag = 'smem constant byte address 0x4 - core index']
  #allocation1 [shape = 'u32[144,128]{1,0:T(1,128)}', space=vmem, size = 0x12000, scoped, tag = 'internal scratch']
  %s0 = inlined_call_operand.vmem [shape: f32[8,256], index: 0, kind: input, shape index: {}]
  %s1 = inlined_call_operand.vmem [shape: f32[1,8,128], index: 1, kind: output, shape index: {}]
  %s2 = sld [smem:[#allocation0]]
  $region14: #{reverse_adaptive_dropblock_channel2d.3} parent=0
    _
  %s4 = ssub.s32 1, %s2
  %s5 = scalar_select 0, %s4, %s2
  // Predicated region
  $region2: #{reverse_adaptive_dropblock_channel2d.3} parent=0 // pred_check
    _
  $region3: #{reverse_adaptive_dropblock_channel2d.3} parent=0 // pred_check_branch
    %7 = sbr.rel (0) target = $region5
  $region4: #{reverse_adaptive_dropblock_channel2d.3} parent=0 // pred_region
    _
  $region5: #{reverse_adaptive_dropblock_channel2d.3} parent=0 // pred_fallthru
    _
  %v8 = vld [vmem:[%s0] sm:$0xff]
  %v9 = vld [vmem:[%s0 + $0x8] sm:$0xff]
  %v10 = vand.u32 2147483647, %v8
  %v11 = vand.u32 2147483647, %v9
  %v12 = vadd.f32 %v10, %v11
  %13 = vadd.xlane.f32.xlu0 %v12
  %v14 = vpop.xlane.xlu0 %13
  %v15 = vrot.slane %v14, 4
  %v16 = vadd.f32 %v14, %v15
  %v17 = vrot.slane %v16, 2
  %v18 = vadd.f32 %v16, %v17
  %v19 = vrot.slane %v18, 1
  %v20 = vadd.f32 %v18, %v19
  %s21 = vtos %v20
  %v22 = vlaneseq
  %v23 = vshrl.u32 %v22, 7
  %v24 = vlaneseq
  %v25 = vand.u32 %v24, 127
  %vm26 = vcmp.eq.s32.totalorder %v23, 0
  %vm27 = vcmp.eq.s32.totalorder %v25, 0
  %vm28 = vmand %vm26, %vm27
  %v29 = vstv %s21
  %v30 = vsel %vm28, %v29, 0.0
  %31 = vst [vmem:[%s1] sm:$0xff] %v30
  // Predicated region
  $region6: #{reverse_adaptive_dropblock_channel2d.3} parent=0 // pred_check
    _
  $region7: #{reverse_adaptive_dropblock_channel2d.3} parent=0 // pred_check_branch
    %33 = sbr.rel (0) target = $region9
  $region8: #{reverse_adaptive_dropblock_channel2d.3} parent=0 // pred_region
    _
  $region9: #{reverse_adaptive_dropblock_channel2d.3} parent=0 // pred_fallthru
    _
  // Predicated region
  $region10: #{reverse_adaptive_dropblock_channel2d.3} parent=0 // pred_check
    _
  $region11: #{reverse_adaptive_dropblock_channel2d.3} parent=0 // pred_check_branch
    %35 = sbr.rel (0) target = $region13
  $region12: #{reverse_adaptive_dropblock_channel2d.3} parent=0 // pred_region
    _
  $region13: #{reverse_adaptive_dropblock_channel2d.3} parent=0 // pred_fallthru
    _

// kernel: reverse_adaptive_dropblock_channel2d.4
$region0: #{reverse_adaptive_dropblock_channel2d.4}
  #allocation0 [shape = 'u32[]', space=smem, size = 0x4, offset = 0x4, fixed_abs, tag = 'smem constant byte address 0x4 - core index']
  #allocation1 [shape = 'u32[144,128]{1,0:T(1,128)}', space=vmem, size = 0x12000, scoped, tag = 'internal scratch']
  #allocation2 [shape = 'f32[1,1]{1,0:T(1,128)S(6)}', space=smem, size = 0x200, scoped, tag = 'scoped memory for reverse_adaptive_dropblock_channel2d.4']
  %s0 = inlined_call_operand.<no memory space> [shape: f32[1,1], index: 0, kind: input, shape index: {}]
  %s1 = inlined_call_operand.vmem [shape: f32[8,256], index: 1, kind: input, shape index: {}]
  %s2 = inlined_call_operand.vmem [shape: f32[8,256], index: 2, kind: input, shape index: {}]
  %s3 = inlined_call_operand.vmem [shape: f32[8,256], index: 3, kind: output, shape index: {}]
  %s4 = sld [smem:[#allocation0]]
  $region22: #{reverse_adaptive_dropblock_channel2d.4} parent=0
    _
  %s6 = ssub.s32 1, %s4
  %s7 = scalar_select 0, %s6, %s4
  %8 = sst [smem:[#allocation2]] %s0
  // Predicated region
  $region2: #{reverse_adaptive_dropblock_channel2d.4} parent=0 // pred_check
    _
  $region3: #{reverse_adaptive_dropblock_channel2d.4} parent=0 // pred_check_branch
    %10 = sbr.rel (0) target = $region5
  $region4: #{reverse_adaptive_dropblock_channel2d.4} parent=0 // pred_region
    _
  $region5: #{reverse_adaptive_dropblock_channel2d.4} parent=0 // pred_fallthru
    _
  // Predicated region
  $region6: #{reverse_adaptive_dropblock_channel2d.4} parent=0 // pred_check
    _
  $region7: #{reverse_adaptive_dropblock_channel2d.4} parent=0 // pred_check_branch
    %12 = sbr.rel (0) target = $region9
  $region8: #{reverse_adaptive_dropblock_channel2d.4} parent=0 // pred_region
    _
  $region9: #{reverse_adaptive_dropblock_channel2d.4} parent=0 // pred_fallthru
    _
  // Predicated region
  $region10: #{reverse_adaptive_dropblock_channel2d.4} parent=0 // pred_check
    _
  $region11: #{reverse_adaptive_dropblock_channel2d.4} parent=0 // pred_check_branch
    %14 = sbr.rel (0) target = $region13
  $region12: #{reverse_adaptive_dropblock_channel2d.4} parent=0 // pred_region
    _
  $region13: #{reverse_adaptive_dropblock_channel2d.4} parent=0 // pred_fallthru
    _
  %s15 = sld [smem:[#allocation2]]
  %v16 = vld [vmem:[%s1] sm:$0xff]
  %v17 = vld [vmem:[%s1 + $0x8] sm:$0xff]
  %v18 = vand.u32 2147483647, %v16
  %v19 = vand.u32 2147483647, %v17
  %v20 = vld [vmem:[%s2] sm:$0xff]
  %v21 = vld [vmem:[%s2 + $0x8] sm:$0xff]
  %v22 = vmul.f32 %v20, 0.1
  %v23 = vmul.f32 %v21, 0.1
  %v24 = vstv %s15
  %v25 = vmul.f32 %v22, %v24
  %v26 = vmul.f32 %v23, %v24
  %v27 = vadd.f32 %v18, %v25
  %v28 = vadd.f32 %v19, %v26
  %29 = vst [vmem:[%s3] sm:$0xff] %v27
  %30 = vst [vmem:[%s3 + $0x8] sm:$0xff] %v28
  // Predicated region
  $region14: #{reverse_adaptive_dropblock_channel2d.4} parent=0 // pred_check
    _
  $region15: #{reverse_adaptive_dropblock_channel2d.4} parent=0 // pred_check_branch
    %32 = sbr.rel (0) target = $region17
  $region16: #{reverse_adaptive_dropblock_channel2d.4} parent=0 // pred_region
    _
  $region17: #{reverse_adaptive_dropblock_channel2d.4} parent=0 // pred_fallthru
    _
  // Predicated region
  $region18: #{reverse_adaptive_dropblock_channel2d.4} parent=0 // pred_check
    _
  $region19: #{reverse_adaptive_dropblock_channel2d.4} parent=0 // pred_check_branch
    %34 = sbr.rel (0) target = $region21
  $region20: #{reverse_adaptive_dropblock_channel2d.4} parent=0 // pred_region
    _
  $region21: #{reverse_adaptive_dropblock_channel2d.4} parent=0 // pred_fallthru
    _

// kernel: reverse_adaptive_dropblock_channel2d.5
$region0: #{reverse_adaptive_dropblock_channel2d.5}
  #allocation0 [shape = 'u32[]', space=smem, size = 0x4, offset = 0x4, fixed_abs, tag = 'smem constant byte address 0x4 - core index']
  #allocation1 [shape = 'u32[144,128]{1,0:T(1,128)}', space=vmem, size = 0x12000, scoped, tag = 'internal scratch']
  #allocation2 [shape = 'f32[1,1]{1,0:T(1,128)S(6)}', space=smem, size = 0x200, scoped, tag = 'scoped memory for reverse_adaptive_dropblock_channel2d.5']
  %s0 = inlined_call_operand.<no memory space> [shape: f32[1,1], index: 0, kind: input, shape index: {}]
  %s1 = inlined_call_operand.vmem [shape: f32[6,256], index: 1, kind: input, shape index: {}]
  %s2 = inlined_call_operand.vmem [shape: f32[8,256], index: 2, kind: input, shape index: {}]
  %s3 = inlined_call_operand.vmem [shape: f32[8,256], index: 3, kind: input, shape index: {}]
  %s4 = inlined_call_operand.vmem [shape: f32[8,256], index: 4, kind: output, shape index: {0}]
  %s5 = inlined_call_operand.vmem [shape: s32[1,8,128], index: 5, kind: output, shape index: {1}]
  %6 = xla_tuple %s4, %s5
  %s7 = sld [smem:[#allocation0]]
  $region34: #{reverse_adaptive_dropblock_channel2d.5} parent=0
    _
  %s9 = ssub.s32 1, %s7
  %s10 = scalar_select 0, %s9, %s7
  %11 = sst [smem:[#allocation2]] %s0
  // Predicated region
  $region2: #{reverse_adaptive_dropblock_channel2d.5} parent=0 // pred_check
    _
  $region3: #{reverse_adaptive_dropblock_channel2d.5} parent=0 // pred_check_branch
    %13 = sbr.rel (0) target = $region5
  $region4: #{reverse_adaptive_dropblock_channel2d.5} parent=0 // pred_region
    _
  $region5: #{reverse_adaptive_dropblock_channel2d.5} parent=0 // pred_fallthru
    _
  // Predicated region
  $region6: #{reverse_adaptive_dropblock_channel2d.5} parent=0 // pred_check
    _
  $region7: #{reverse_adaptive_dropblock_channel2d.5} parent=0 // pred_check_branch
    %15 = sbr.rel (0) target = $region9
  $region8: #{reverse_adaptive_dropblock_channel2d.5} parent=0 // pred_region
    _
  $region9: #{reverse_adaptive_dropblock_channel2d.5} parent=0 // pred_fallthru
    _
  // Predicated region
  $region10: #{reverse_adaptive_dropblock_channel2d.5} parent=0 // pred_check
    _
  $region11: #{reverse_adaptive_dropblock_channel2d.5} parent=0 // pred_check_branch
    %17 = sbr.rel (0) target = $region13
  $region12: #{reverse_adaptive_dropblock_channel2d.5} parent=0 // pred_region
    _
  $region13: #{reverse_adaptive_dropblock_channel2d.5} parent=0 // pred_fallthru
    _
  // Predicated region
  $region14: #{reverse_adaptive_dropblock_channel2d.5} parent=0 // pred_check
    _
  $region15: #{reverse_adaptive_dropblock_channel2d.5} parent=0 // pred_check_branch
    %19 = sbr.rel (0) target = $region17
  $region16: #{reverse_adaptive_dropblock_channel2d.5} parent=0 // pred_region
    _
  $region17: #{reverse_adaptive_dropblock_channel2d.5} parent=0 // pred_fallthru
    _
  %s20 = sld [smem:[#allocation2]]
  %v21 = vld [vmem:[%s3] sm:$0xff]
  %v22 = vld [vmem:[%s3 + $0x8] sm:$0xff]
  %v23 = vstv %s20
  %vm24 = vcmp.lt.f32.partialorder %v21, %v23
  %vm25 = vcmp.lt.f32.partialorder %v22, %v23
  %v26 = vsel %vm24, 1, 0
  %v27 = vsel %vm25, 1, 0
  %v28 = vcvt.s32.f32 %v26
  %v29 = vcvt.s32.f32 %v27
  %30 = vrot.lane.b32.xlu0 %v28, 1
  %v31 = vpop.permute.xlu0 %30
  %32 = vrot.lane.b32.xlu0 %v29, 1
  %v33 = vpop.permute.xlu0 %32
  %v34 = vlaneseq
  %v35 = vand.u32 %v34, 127
  %vm36 = vcmp.lt.s32.totalorder %v35, 1
  %v37 = vsel %vm36, %v31, %v33
  %v38 = vsel %vm36, %v33, %v31
  %v39 = vld [vmem:[%s1] ss:$8 sm:$0x3]
  %v41 = vlaneseq
  %v42 = vshrl.u32 %v41, 7
  %v43 = vsub.s32 0, %v42
  %v44 = vrot.slane %v39, %v43
  %v45 = vlaneseq
  %v46 = vshrl.u32 %v45, 7
  %v47 = vsub.s32 1, %v46
  %v48 = vrot.slane %v39, %v47
  %v51 = vmul.f32 %v38, %v44
  %v52 = vmul.f32 %v37, %v48
  %v53 = vadd.f32 %v51, 0.0
  %v54 = vadd.f32 %v52, 0.0
  %s55 = scalar_lea.vmem %s1, 1
  %v56 = vld [vmem:[%s55] ss:$8 sm:$0x3]
  %v58 = vlaneseq
  %v59 = vshrl.u32 %v58, 7
  %v60 = vsub.s32 0, %v59
  %v61 = vrot.slane %v56, %v60
  %v62 = vlaneseq
  %v63 = vshrl.u32 %v62, 7
  %v64 = vsub.s32 1, %v63
  %v65 = vrot.slane %v56, %v64
  %v68 = vmul.f32 %v28, %v61
  %v69 = vmul.f32 %v29, %v65
  %v70 = vadd.f32 %v53, %v68
  %v71 = vadd.f32 %v54, %v69
  %72 = vrot.lane.b32.xlu0 %v28, 127
  %v73 = vpop.permute.xlu0 %72
  %74 = vrot.lane.b32.xlu0 %v29, 127
  %v75 = vpop.permute.xlu0 %74
  %vm76 = vcmp.lt.s32.totalorder %v35, 127
  %v77 = vsel %vm76, %v73, %v75
  %v78 = vsel %vm76, %v75, %v73
  %s79 = scalar_lea.vmem %s1, 2
  %v80 = vld [vmem:[%s79] ss:$8 sm:$0x3]
  %v82 = vlaneseq
  %v83 = vshrl.u32 %v82, 7
  %v84 = vsub.s32 0, %v83
  %v85 = vrot.slane %v80, %v84
  %v86 = vlaneseq
  %v87 = vshrl.u32 %v86, 7
  %v88 = vsub.s32 1, %v87
  %v89 = vrot.slane %v80, %v88
  %v92 = vmul.f32 %v77, %v85
  %v93 = vmul.f32 %v78, %v89
  %v94 = vadd.f32 %v70, %v92
  %v95 = vadd.f32 %v71, %v93
  %96 = vrot.lane.b32.xlu0 %v94, 16
  %v97 = vpop.permute.xlu0 %96
  %98 = vrot.lane.b32.xlu0 %v95, 16
  %v99 = vpop.permute.xlu0 %98
  %vm100 = vcmp.lt.s32.totalorder %v35, 16
  %v101 = vsel %vm100, %v97, %v99
  %v102 = vsel %vm100, %v99, %v97
  %s103 = scalar_lea.vmem %s1, 3
  %v104 = vld [vmem:[%s103] ss:$8 sm:$0x3]
  %v106 = vlaneseq
  %v107 = vshrl.u32 %v106, 7
  %v108 = vsub.s32 0, %v107
  %v109 = vrot.slane %v104, %v108
  %v110 = vlaneseq
  %v111 = vshrl.u32 %v110, 7
  %v112 = vsub.s32 1, %v111
  %v113 = vrot.slane %v104, %v112
  %v116 = vmul.f32 %v102, %v109
  %v117 = vmul.f32 %v101, %v113
  %v118 = vadd.f32 %v116, 0.0
  %v119 = vadd.f32 %v117, 0.0
  %s120 = scalar_lea.vmem %s1, 4
  %v121 = vld [vmem:[%s120] ss:$8 sm:$0x3]
  %v123 = vlaneseq
  %v124 = vshrl.u32 %v123, 7
  %v125 = vsub.s32 0, %v124
  %v126 = vrot.slane %v121, %v125
  %v127 = vlaneseq
  %v128 = vshrl.u32 %v127, 7
  %v129 = vsub.s32 1, %v128
  %v130 = vrot.slane %v121, %v129
  %v133 = vmul.f32 %v94, %v126
  %v134 = vmul.f32 %v95, %v130
  %v135 = vadd.f32 %v118, %v133
  %v136 = vadd.f32 %v119, %v134
  %137 = vrot.lane.b32.xlu0 %v94, 112
  %v138 = vpop.permute.xlu0 %137
  %139 = vrot.lane.b32.xlu0 %v95, 112
  %v140 = vpop.permute.xlu0 %139
  %vm141 = vcmp.lt.s32.totalorder %v35, 112
  %v142 = vsel %vm141, %v138, %v140
  %v143 = vsel %vm141, %v140, %v138
  %s144 = scalar_lea.vmem %s1, 5
  %v145 = vld [vmem:[%s144] ss:$8 sm:$0x3]
  %v147 = vlaneseq
  %v148 = vshrl.u32 %v147, 7
  %v149 = vsub.s32 0, %v148
  %v150 = vrot.slane %v145, %v149
  %v151 = vlaneseq
  %v152 = vshrl.u32 %v151, 7
  %v153 = vsub.s32 1, %v152
  %v154 = vrot.slane %v145, %v153
  %v157 = vmul.f32 %v142, %v150
  %v158 = vmul.f32 %v143, %v154
  %v159 = vadd.f32 %v135, %v157
  %v160 = vadd.f32 %v136, %v158
  %vm161 = vcmp.eq.f32.partialorder %v159, 0.0
  %vm162 = vcmp.eq.f32.partialorder %v160, 0.0
  %v163 = vsel %vm161, 1, 0
  %v164 = vsel %vm162, 1, 0
  %v165 = vcvt.s32.f32 %v163
  %v166 = vcvt.s32.f32 %v164
  %v167 = vld [vmem:[%s2] sm:$0xff]
  %v168 = vld [vmem:[%s2 + $0x8] sm:$0xff]
  %v169 = vmul.f32 %v167, %v165
  %v170 = vmul.f32 %v168, %v166
  %171 = vst [vmem:[%s4] sm:$0xff] %v169
  %172 = vst [vmem:[%s4 + $0x8] sm:$0xff] %v170
  %v173 = vadd.f32 %v165, %v166
  %174 = vadd.xlane.f32.xlu0 %v173
  %v175 = vpop.xlane.xlu0 %174
  %v176 = vrot.slane %v175, 4
  %v177 = vadd.f32 %v175, %v176
  %v178 = vrot.slane %v177, 2
  %v179 = vadd.f32 %v177, %v178
  %v180 = vrot.slane %v179, 1
  %v181 = vadd.f32 %v179, %v180
  %s182 = vtos %v181
  %v183 = vlaneseq
  %v184 = vshrl.u32 %v183, 7
  %vm185 = vcmp.eq.s32.totalorder %v184, 0
  %vm186 = vcmp.eq.s32.totalorder %v35, 0
  %vm187 = vmand %vm185, %vm186
  %s188 = scvt.f32.s32.to.zero.pseudo %s182
  %v189 = vstv %s188
  %v190 = vsel %vm187, %v189, 0
  %191 = vst [vmem:[%s5] sm:$0xff] %v190
  // Predicated region
  $region18: #{reverse_adaptive_dropblock_channel2d.5} parent=0 // pred_check
    _
  $region19: #{reverse_adaptive_dropblock_channel2d.5} parent=0 // pred_check_branch
    %193 = sbr.rel (0) target = $region21
  $region20: #{reverse_adaptive_dropblock_channel2d.5} parent=0 // pred_region
    _
  $region21: #{reverse_adaptive_dropblock_channel2d.5} parent=0 // pred_fallthru
    _
  // Predicated region
  $region22: #{reverse_adaptive_dropblock_channel2d.5} parent=0 // pred_check
    _
  $region23: #{reverse_adaptive_dropblock_channel2d.5} parent=0 // pred_check_branch
    %195 = sbr.rel (0) target = $region25
  $region24: #{reverse_adaptive_dropblock_channel2d.5} parent=0 // pred_region
    _
  $region25: #{reverse_adaptive_dropblock_channel2d.5} parent=0 // pred_fallthru
    _
  // Predicated region
  $region26: #{reverse_adaptive_dropblock_channel2d.5} parent=0 // pred_check
    _
  $region27: #{reverse_adaptive_dropblock_channel2d.5} parent=0 // pred_check_branch
    %197 = sbr.rel (0) target = $region29
  $region28: #{reverse_adaptive_dropblock_channel2d.5} parent=0 // pred_region
    _
  $region29: #{reverse_adaptive_dropblock_channel2d.5} parent=0 // pred_fallthru
    _
  // Predicated region
  $region30: #{reverse_adaptive_dropblock_channel2d.5} parent=0 // pred_check
    _
  $region31: #{reverse_adaptive_dropblock_channel2d.5} parent=0 // pred_check_branch
    %199 = sbr.rel (0) target = $region33
  $region32: #{reverse_adaptive_dropblock_channel2d.5} parent=0 // pred_region
    _
  $region33: #{reverse_adaptive_dropblock_channel2d.5} parent=0 // pred_fallthru
    _

</llo_original>
